<compile_context>
chip_gen: v5e
topology: v5e:2x2
jax: 0.10.0
libtpu: 0.0.40
codegen_flags: <defaults>
</compile_context>

<pallas_src>
import jax
import jax.numpy as jnp
import numpy as np
from jax.experimental import pallas as pl
from jax.experimental.pallas import tpu as pltpu


def _round_up(x, m):
    return ((x + m - 1) // m) * m


# ---------------------------------------------------------------------------
# Pallas kernel: fused 4-layer MLP in transposed (feature-major) layout.
#   xt_ref : (K_pad, tile_b) bf16  concat(obs..., act...)^T, zero-padded
#   w1t    : (fc1,  K_pad)   bf16  fc1 weight, transposed
#   w2t    : (fc2,  fc1)     bf16
#   w3t    : (fc3,  fc2)     bf16
#   p      : (128, 8)        f32   col0=b1, col1=b2, col2=b3, col3=w4, [0,4]=b4
#   o      : (1, tile_b)     f32   q^T (batch on the lane axis)
# ---------------------------------------------------------------------------
def _make_critic_kernel(fc1, fc2, fc3):
    def kernel(xt_ref, w1t_ref, w2t_ref, w3t_ref, p_ref, o_ref):
        # fc1: one MXU pass over the whole concatenated feature vector.
        h1 = jnp.dot(w1t_ref[...], xt_ref[...],
                     preferred_element_type=jnp.float32)
        h1 = jnp.maximum(h1 + p_ref[0:fc1, 0:1], 0.0)

        # fc2
        h2 = jnp.dot(w2t_ref[...], h1.astype(jnp.bfloat16),
                     preferred_element_type=jnp.float32)
        h2 = jnp.maximum(h2 + p_ref[0:fc2, 1:2], 0.0)

        # fc3
        h3 = jnp.dot(w3t_ref[...], h2.astype(jnp.bfloat16),
                     preferred_element_type=jnp.float32)
        h3 = jnp.maximum(h3 + p_ref[0:fc3, 2:3], 0.0)

        # fc4 (fc3 -> 1): VPU multiply + sublane reduction, fp32, lane-dense.
        q = jnp.sum(h3 * p_ref[0:fc3, 3:4], axis=0, keepdims=True)
        o_ref[...] = (q + p_ref[0:1, 4:5]).astype(o_ref.dtype)

    return kernel


# ---------------------------------------------------------------------------
# Parameter packing: transposed bf16 weights + one small fp32 (128, 8) slab.
# ---------------------------------------------------------------------------
def pack_params(params):
    in_dim, fc1 = params["w1"].shape
    fc2 = params["w2"].shape[1]
    fc3 = params["w3"].shape[1]
    k_pad = _round_up(max(in_dim, 16), 16)          # bf16 sublane packing

    w1t = jnp.zeros((fc1, k_pad), jnp.float32)
    w1t = w1t.at[:, :in_dim].set(params["w1"].T).astype(jnp.bfloat16)
    w2t = params["w2"].T.astype(jnp.bfloat16)
    w3t = params["w3"].T.astype(jnp.bfloat16)

    rows = max(fc1, fc2, fc3, 8)
    p = jnp.zeros((rows, 8), jnp.float32)
    p = p.at[:fc1, 0].set(params["b1"].reshape(-1))
    p = p.at[:fc2, 1].set(params["b2"].reshape(-1))
    p = p.at[:fc3, 2].set(params["b3"].reshape(-1))
    p = p.at[:fc3, 3].set(params["w4"].reshape(-1))
    p = p.at[0, 4].set(params["b4"].reshape(-1)[0])

    return dict(w1t=w1t, w2t=w2t, w3t=w3t, p=p,
                in_dim=int(in_dim), k_pad=int(k_pad),
                fc_dims=(int(fc1), int(fc2), int(fc3)))


# ---------------------------------------------------------------------------
# Forward pass matching Critic_v2.forward (use_batch_norm=False)
# ---------------------------------------------------------------------------
def critic_v2_forward(observation_list, action_list, packed, *, tile_b_max=2048):
    fc1, fc2, fc3 = packed["fc_dims"]
    k_pad, in_dim = packed["k_pad"], packed["in_dim"]

    x = jnp.concatenate(list(observation_list) + list(action_list), axis=1)
    batch, feat = x.shape
    assert feat == in_dim, "feature dims mismatch"

    # Batch tiling: tile_b multiple of 128 (lane-dense), padded batch a
    # multiple of tile_b.  Prefer >= 2 grid steps (v7x has 2 TensorCores).
    tile_b_max = max(128, (int(tile_b_max) // 128) * 128)
    tile_b = min(tile_b_max, _round_up(batch, 128))
    padded = _round_up(batch, tile_b)
    if padded // tile_b < 2 and tile_b % 256 == 0:
        tile_b //= 2
    grid = padded // tile_b

    # Single lane-dense bf16 transposed input (concat + pad + cast fused here,
    # so the kernel does no per-step input casts and fc1 is one MXU pass).
    x = jnp.pad(x.astype(jnp.bfloat16),
                ((0, padded - batch), (0, k_pad - in_dim)))
    xt = x.T                                          # (k_pad, padded)

    const = lambda i: (0, 0)
    out = pl.pallas_call(
        _make_critic_kernel(fc1, fc2, fc3),
        out_shape=jax.ShapeDtypeStruct((1, padded), jnp.float32),
        grid=(grid,),
        in_specs=[
            pl.BlockSpec((k_pad, tile_b), lambda i: (0, i)),   # x^T batch tile
            pl.BlockSpec(packed["w1t"].shape, const),          # resident weights
            pl.BlockSpec(packed["w2t"].shape, const),
            pl.BlockSpec(packed["w3t"].shape, const),
            pl.BlockSpec(packed["p"].shape, const),            # bias/w4 slab
        ],
        out_specs=pl.BlockSpec((1, tile_b), lambda i: (0, i)), # lane-dense q^T
        compiler_params=pltpu.CompilerParams(
            dimension_semantics=("parallel",),
            vmem_limit_bytes=32 * 1024 * 1024,
        ),
    )(xt, packed["w1t"], packed["w2t"], packed["w3t"], packed["p"])

    return out[0, :batch].reshape(batch, 1)


# ---------------------------------------------------------------------------
# Deterministic parameter init (mirrors reset_parameters / nn.Linear defaults)
# ---------------------------------------------------------------------------
def init_params(key, in_dim, fc1_units=128, fc2_units=64, fc3_units=32):
    ks = jax.random.split(key, 8)

    def uniform(k, shape, lim):
        return jax.random.uniform(k, shape, jnp.float32, -lim, lim)

    # hidden_init uses weight.size()[0] == out_features as "fan_in"; reproduce it.
    w1 = uniform(ks[0], (in_dim, fc1_units), 1.0 / np.sqrt(fc1_units))
    w2 = uniform(ks[1], (fc1_units, fc2_units), 1.0 / np.sqrt(fc2_units))
    w3 = uniform(ks[2], (fc2_units, fc3_units), 1.0 / np.sqrt(fc3_units))
    w4 = uniform(ks[3], (fc3_units, 1), 0.003)

    # Biases keep nn.Linear default init: U(-1/sqrt(fan_in), 1/sqrt(fan_in)).
    b1 = uniform(ks[4], (1, fc1_units), 1.0 / np.sqrt(in_dim))
    b2 = uniform(ks[5], (1, fc2_units), 1.0 / np.sqrt(fc1_units))
    b3 = uniform(ks[6], (1, fc3_units), 1.0 / np.sqrt(fc2_units))
    b4 = uniform(ks[7], (1, 1), 1.0 / np.sqrt(fc3_units))

    return dict(w1=w1, b1=b1, w2=w2, b2=b2, w3=w3, b3=b3, w4=w4, b4=b4)


def _reference(feats, params):
    x = jnp.concatenate(feats, axis=1)
    h = jnp.maximum(x @ params["w1"] + params["b1"], 0.0)
    h = jnp.maximum(h @ params["w2"] + params["b2"], 0.0)
    h = jnp.maximum(h @ params["w3"] + params["b3"], 0.0)
    return h @ params["w4"] + params["b4"]


if __name__ == "__main__":
    key = jax.random.PRNGKey(0)

    # Small multi-agent setup: 3 agents.
    obs_dim_n = [10, 12, 14]      # per-agent observation dims
    action_dim_n = [4, 5, 6]      # per-agent action dims
    in_dim = sum(obs_dim_n) + sum(action_dim_n)   # 51

    k_param, k_obs, k_act = jax.random.split(key, 3)
    params = init_params(k_param, in_dim)
    packed = pack_params(params)

    def make_inputs(batch, ko, ka):
        obs_keys = jax.random.split(ko, len(obs_dim_n))
        act_keys = jax.random.split(ka, len(action_dim_n))
        obs = [jax.random.normal(obs_keys[i], (batch, d), jnp.float32)
               for i, d in enumerate(obs_dim_n)]
        act = [jax.random.normal(act_keys[i], (batch, d), jnp.float32)
               for i, d in enumerate(action_dim_n)]
        return obs, act

    # Case 1: tiny batch -> single 128-row tile.
    observation, action = make_inputs(8, k_obs, k_act)
    q = jax.block_until_ready(critic_v2_forward(observation, action, packed))
    q_ref = _reference(observation + action, params)
    np.testing.assert_allclose(np.asarray(q), np.asarray(q_ref),
                               rtol=2e-2, atol=5e-3)
    assert q.shape == (8, 1)

    # Case 2: batch not a multiple of 128 -> padding path.
    k2o, k2a = jax.random.split(jax.random.PRNGKey(1))
    obs2, act2 = make_inputs(40, k2o, k2a)
    q2 = jax.block_until_ready(critic_v2_forward(obs2, act2, packed))
    q2_ref = _reference(obs2 + act2, params)
    np.testing.assert_allclose(np.asarray(q2), np.asarray(q2_ref),
                               rtol=2e-2, atol=5e-3)
    assert q2.shape == (40, 1)

    # Case 3: multi-step grid (3 batch tiles of 128) exercising the parallel
    # batch axis, resident weights across steps, and padding.
    k3o, k3a = jax.random.split(jax.random.PRNGKey(2))
    obs3, act3 = make_inputs(300, k3o, k3a)
    q3 = jax.block_until_ready(
        critic_v2_forward(obs3, act3, packed, tile_b_max=128))
    q3_ref = _reference(obs3 + act3, params)
    np.testing.assert_allclose(np.asarray(q3), np.asarray(q3_ref),
                               rtol=2e-2, atol=5e-3)
    assert q3.shape == (300, 1)

    print("KERNEL_OK")
</pallas_src>

<mosaic_0001>
module attributes {stable_mosaic.version = 11 : i64} {
  func.func @kernel(%arg0: i32, %arg1: memref<64x128xbf16, #tpu.memory_space<vmem>>, %arg2: memref<128x64xbf16, #tpu.memory_space<vmem>>, %arg3: memref<64x128xbf16, #tpu.memory_space<vmem>>, %arg4: memref<32x64xbf16, #tpu.memory_space<vmem>>, %arg5: memref<128x8xf32, #tpu.memory_space<vmem>>, %arg6: memref<1x128xf32, #tpu.memory_space<vmem>>) attributes {dimension_semantics = [#tpu.dimension_semantics<parallel>], iteration_bounds = array<i64: 1>, scalar_prefetch = 0 : i64, scratch_operands = 0 : i64, tpu.core_type = #tpu.core_type<tc>, window_params = [{transform_indices = @transform_0, window_bounds = array<i64: 64, 128>}, {pipeline_mode = #tpu.pipeline_mode<synchronous>, transform_indices = @transform_1, window_bounds = array<i64: 128, 64>}, {pipeline_mode = #tpu.pipeline_mode<synchronous>, transform_indices = @transform_2, window_bounds = array<i64: 64, 128>}, {pipeline_mode = #tpu.pipeline_mode<synchronous>, transform_indices = @transform_3, window_bounds = array<i64: 32, 64>}, {pipeline_mode = #tpu.pipeline_mode<synchronous>, transform_indices = @transform_4, window_bounds = array<i64: 128, 8>}, {transform_indices = @transform_5, window_bounds = array<i64: 1, 128>}]} {
    %c0 = arith.constant 0 : index
    %c0_0 = arith.constant 0 : index
    %0 = vector.load %arg2[%c0, %c0_0] : memref<128x64xbf16, #tpu.memory_space<vmem>>, vector<128x64xbf16>
    %c0_1 = arith.constant 0 : index
    %c0_2 = arith.constant 0 : index
    %1 = vector.load %arg1[%c0_1, %c0_2] : memref<64x128xbf16, #tpu.memory_space<vmem>>, vector<64x128xbf16>
    %cst = arith.constant dense<0.000000e+00> : vector<128x128xf32>
    %2 = tpu.matmul %0, %1, %cst {dimension_numbers = #tpu.dot_dimension_numbers<[1], [0], [0], [1], [0, 0, 1, 1], [], []>} : vector<128x64xbf16>, vector<64x128xbf16>, vector<128x128xf32> -> vector<128x128xf32>
    %c0_3 = arith.constant 0 : index
    %c0_4 = arith.constant 0 : index
    %3 = vector.load %arg5[%c0_3, %c0_4] : memref<128x8xf32, #tpu.memory_space<vmem>>, vector<128x1xf32>
    %4 = vector.broadcast %3 : vector<128x1xf32> to vector<128x128xf32>
    %5 = arith.addf %2, %4 : vector<128x128xf32>
    %cst_5 = arith.constant 0.000000e+00 : f32
    %6 = vector.broadcast %cst_5 : f32 to vector<128x128xf32>
    %7 = arith.maximumf %5, %6 : vector<128x128xf32>
    %c0_6 = arith.constant 0 : index
    %c0_7 = arith.constant 0 : index
    %8 = vector.load %arg3[%c0_6, %c0_7] : memref<64x128xbf16, #tpu.memory_space<vmem>>, vector<64x128xbf16>
    %9 = arith.truncf %7 : vector<128x128xf32> to vector<128x128xbf16>
    %cst_8 = arith.constant dense<0.000000e+00> : vector<64x128xf32>
    %10 = tpu.matmul %8, %9, %cst_8 {dimension_numbers = #tpu.dot_dimension_numbers<[1], [0], [0], [1], [0, 0, 1, 1], [], []>} : vector<64x128xbf16>, vector<128x128xbf16>, vector<64x128xf32> -> vector<64x128xf32>
    %c0_9 = arith.constant 0 : index
    %c1 = arith.constant 1 : index
    %11 = vector.load %arg5[%c0_9, %c1] : memref<128x8xf32, #tpu.memory_space<vmem>>, vector<64x1xf32>
    %12 = vector.broadcast %11 : vector<64x1xf32> to vector<64x128xf32>
    %13 = arith.addf %10, %12 : vector<64x128xf32>
    %cst_10 = arith.constant 0.000000e+00 : f32
    %14 = vector.broadcast %cst_10 : f32 to vector<64x128xf32>
    %15 = arith.maximumf %13, %14 : vector<64x128xf32>
    %c0_11 = arith.constant 0 : index
    %c0_12 = arith.constant 0 : index
    %16 = vector.load %arg4[%c0_11, %c0_12] : memref<32x64xbf16, #tpu.memory_space<vmem>>, vector<32x64xbf16>
    %17 = arith.truncf %15 : vector<64x128xf32> to vector<64x128xbf16>
    %cst_13 = arith.constant dense<0.000000e+00> : vector<32x128xf32>
    %18 = tpu.matmul %16, %17, %cst_13 {dimension_numbers = #tpu.dot_dimension_numbers<[1], [0], [0], [1], [0, 0, 1, 1], [], []>} : vector<32x64xbf16>, vector<64x128xbf16>, vector<32x128xf32> -> vector<32x128xf32>
    %c0_14 = arith.constant 0 : index
    %c2 = arith.constant 2 : index
    %19 = vector.load %arg5[%c0_14, %c2] : memref<128x8xf32, #tpu.memory_space<vmem>>, vector<32x1xf32>
    %20 = vector.broadcast %19 : vector<32x1xf32> to vector<32x128xf32>
    %21 = arith.addf %18, %20 : vector<32x128xf32>
    %cst_15 = arith.constant 0.000000e+00 : f32
    %22 = vector.broadcast %cst_15 : f32 to vector<32x128xf32>
    %23 = arith.maximumf %21, %22 : vector<32x128xf32>
    %c0_16 = arith.constant 0 : index
    %c3 = arith.constant 3 : index
    %24 = vector.load %arg5[%c0_16, %c3] : memref<128x8xf32, #tpu.memory_space<vmem>>, vector<32x1xf32>
    %25 = vector.broadcast %24 : vector<32x1xf32> to vector<32x128xf32>
    %26 = arith.mulf %23, %25 : vector<32x128xf32>
    %cst_17 = arith.constant dense<0.000000e+00> : vector<128xf32>
    %27 = vector.multi_reduction <add>, %26, %cst_17 [0] : vector<32x128xf32> to vector<128xf32>
    %28 = vector.shape_cast %27 : vector<128xf32> to vector<1x128xf32>
    %c0_18 = arith.constant 0 : index
    %c4 = arith.constant 4 : index
    %29 = vector.load %arg5[%c0_18, %c4] : memref<128x8xf32, #tpu.memory_space<vmem>>, vector<1x1xf32>
    %30 = vector.broadcast %29 : vector<1x1xf32> to vector<1x128xf32>
    %31 = arith.addf %28, %30 : vector<1x128xf32>
    %c0_19 = arith.constant 0 : index
    %c0_20 = arith.constant 0 : index
    %32 = vector.load %arg6[%c0_19, %c0_20] : memref<1x128xf32, #tpu.memory_space<vmem>>, vector<1x128xf32>
    tpu.vector_store %arg6[%c0_19, %c0_20], %31 {strides = array<i32>} : memref<1x128xf32, #tpu.memory_space<vmem>>, vector<1x128xf32>,
    return
  }
  func.func @transform_0(%arg0: i32) -> (i32, i32) {
    %c0_i32 = arith.constant 0 : i32
    %c0_i32_0 = arith.constant 0 : i32
    return %c0_i32, %arg0 : i32, i32
  }
  func.func @transform_1(%arg0: i32) -> (i32, i32) {
    %c0_i32 = arith.constant 0 : i32
    %c0_i32_0 = arith.constant 0 : i32
    %c0_i32_1 = arith.constant 0 : i32
    return %c0_i32, %c0_i32_0 : i32, i32
  }
  func.func @transform_2(%arg0: i32) -> (i32, i32) {
    %c0_i32 = arith.constant 0 : i32
    %c0_i32_0 = arith.constant 0 : i32
    %c0_i32_1 = arith.constant 0 : i32
    return %c0_i32, %c0_i32_0 : i32, i32
  }
  func.func @transform_3(%arg0: i32) -> (i32, i32) {
    %c0_i32 = arith.constant 0 : i32
    %c0_i32_0 = arith.constant 0 : i32
    %c0_i32_1 = arith.constant 0 : i32
    return %c0_i32, %c0_i32_0 : i32, i32
  }
  func.func @transform_4(%arg0: i32) -> (i32, i32) {
    %c0_i32 = arith.constant 0 : i32
    %c0_i32_0 = arith.constant 0 : i32
    %c0_i32_1 = arith.constant 0 : i32
    return %c0_i32, %c0_i32_0 : i32, i32
  }
  func.func @transform_5(%arg0: i32) -> (i32, i32) {
    %c0_i32 = arith.constant 0 : i32
    %c0_i32_0 = arith.constant 0 : i32
    return %c0_i32, %arg0 : i32, i32
  }
}

</mosaic_0001>

<llo_original>
// kernel: tpu_custom_call.1
$region0: #{tpu_custom_call.1}
  #allocation0 [shape = 'u32[]', space=smem, size = 0x4, offset = 0x4, fixed_abs, tag = 'smem constant byte address 0x4 - core index']
  #allocation1 [shape = 'u32[72,128]{1,0:T(1,128)}', space=vmem, size = 0x9000, scoped, tag = 'internal scratch']
  %s0 = inlined_call_operand.vmem [shape: bf16[64,128], index: 0, kind: input, shape index: {}]
  %s1 = inlined_call_operand.vmem [shape: bf16[128,64], index: 1, kind: input, shape index: {}]
  %s2 = inlined_call_operand.vmem [shape: bf16[64,128], index: 2, kind: input, shape index: {}]
  %s3 = inlined_call_operand.vmem [shape: bf16[32,64], index: 3, kind: input, shape index: {}]
  %s4 = inlined_call_operand.vmem [shape: f32[128,8], index: 4, kind: input, shape index: {}]
  %s5 = inlined_call_operand.hbm [shape: f32[1,128], index: 5, kind: output, shape index: {}]
  %s6 = sld [smem:[#allocation0]]
  $region30: #{tpu_custom_call.1} parent=0
    _
  %s8 = ssub.s32 1, %s6
  %s9 = scalar_select 0, %s8, %s6
  $region1: #{tpu_custom_call.1} parent=0
    #allocation2 [shape = 'u8[512]{0}', space=vmem, size = 0x400, scoped, tag = 'output window, operand 0, single buffered']
    #allocation3 [shape = 's32[1]{0}', space=sflag, size = 0x4, scoped, tag = 'scoped memory for tpu_custom_call.1']
    %10 = vsyncpa [#allocation3], 0
    // Predicated region
    $region2: #{tpu_custom_call.1} parent=1 // pred_check
      _
    $region3: #{tpu_custom_call.1} parent=1 // pred_check_branch
      %12 = sbr.rel (0) target = $region5
    $region4: #{tpu_custom_call.1} parent=1 // pred_region
      _
    $region5: #{tpu_custom_call.1} parent=1 // pred_fallthru
      _
    // Predicated region
    $region6: #{tpu_custom_call.1} parent=1 // pred_check
      _
    $region7: #{tpu_custom_call.1} parent=1 // pred_check_branch
      %14 = sbr.rel (0) target = $region9
    $region8: #{tpu_custom_call.1} parent=1 // pred_region
      _
    $region9: #{tpu_custom_call.1} parent=1 // pred_fallthru
      _
    // Predicated region
    $region10: #{tpu_custom_call.1} parent=1 // pred_check
      _
    $region11: #{tpu_custom_call.1} parent=1 // pred_check_branch
      %16 = sbr.rel (0) target = $region13
    $region12: #{tpu_custom_call.1} parent=1 // pred_region
      _
    $region13: #{tpu_custom_call.1} parent=1 // pred_fallthru
      _
    // Predicated region
    $region14: #{tpu_custom_call.1} parent=1 // pred_check
      _
    $region15: #{tpu_custom_call.1} parent=1 // pred_check_branch
      %18 = sbr.rel (0) target = $region17
    $region16: #{tpu_custom_call.1} parent=1 // pred_region
      _
    $region17: #{tpu_custom_call.1} parent=1 // pred_fallthru
      _
    // Predicated region
    $region18: #{tpu_custom_call.1} parent=1 // pred_check
      _
    $region19: #{tpu_custom_call.1} parent=1 // pred_check_branch
      %20 = sbr.rel (0) target = $region21
    $region20: #{tpu_custom_call.1} parent=1 // pred_region
      _
    $region21: #{tpu_custom_call.1} parent=1 // pred_fallthru
      _
    %v22 = vld [vmem:[%s1] sm:$0xf]
    %v23 = vld [vmem:[%s1 + $0x4] sm:$0xf]
    %v24 = vld [vmem:[%s1 + $0x8] sm:$0xf]
    %v25 = vld [vmem:[%s1 + $0xc] sm:$0xf]
    %v26 = vld [vmem:[%s1 + $0x10] sm:$0xf]
    %v27 = vld [vmem:[%s1 + $0x14] sm:$0xf]
    %v28 = vld [vmem:[%s1 + $0x18] sm:$0xf]
    %v29 = vld [vmem:[%s1 + $0x1c] sm:$0xf]
    %v30 = vld [vmem:[%s1 + $0x20] sm:$0xf]
    %v31 = vld [vmem:[%s1 + $0x24] sm:$0xf]
    %v32 = vld [vmem:[%s1 + $0x28] sm:$0xf]
    %v33 = vld [vmem:[%s1 + $0x2c] sm:$0xf]
    %v34 = vld [vmem:[%s1 + $0x30] sm:$0xf]
    %v35 = vld [vmem:[%s1 + $0x34] sm:$0xf]
    %v36 = vld [vmem:[%s1 + $0x38] sm:$0xf]
    %v37 = vld [vmem:[%s1 + $0x3c] sm:$0xf]
    %v38 = vld [vmem:[%s0] sm:$0xf]
    %v39 = vld [vmem:[%s0 + $0x4] sm:$0xf]
    %v40 = vld [vmem:[%s0 + $0x8] sm:$0xf]
    %v41 = vld [vmem:[%s0 + $0xc] sm:$0xf]
    %v42 = vld [vmem:[%s0 + $0x10] sm:$0xf]
    %v43 = vld [vmem:[%s0 + $0x14] sm:$0xf]
    %v44 = vld [vmem:[%s0 + $0x18] sm:$0xf]
    %v45 = vld [vmem:[%s0 + $0x1c] sm:$0xf]
    %v46 = vld [vmem:[%s4] sm:$0xff]
    %v47 = vld [vmem:[%s4 + $0x8] sm:$0xff]
    %v48 = vld [vmem:[%s4 + $0x10] sm:$0xff]
    %v49 = vld [vmem:[%s4 + $0x18] sm:$0xff]
    %v50 = vld [vmem:[%s4 + $0x20] sm:$0xff]
    %v51 = vld [vmem:[%s4 + $0x28] sm:$0xff]
    %v52 = vld [vmem:[%s4 + $0x30] sm:$0xff]
    %v53 = vld [vmem:[%s4 + $0x38] sm:$0xff]
    %v54 = vld [vmem:[%s4 + $0x40] sm:$0xff]
    %v55 = vld [vmem:[%s4 + $0x48] sm:$0xff]
    %v56 = vld [vmem:[%s4 + $0x50] sm:$0xff]
    %v57 = vld [vmem:[%s4 + $0x58] sm:$0xff]
    %v58 = vld [vmem:[%s4 + $0x60] sm:$0xff]
    %v59 = vld [vmem:[%s4 + $0x68] sm:$0xff]
    %v60 = vld [vmem:[%s4 + $0x70] sm:$0xff]
    %v61 = vld [vmem:[%s4 + $0x78] sm:$0xff]
    %63 = vset.pattern.permute.xlu0 0
    %64 = vperm.xlu0 %63, %v46
    %v65 = vpop.permute.xlu0 %64
    %68 = vset.pattern.permute.xlu0 0
    %69 = vperm.xlu0 %68, %v47
    %v70 = vpop.permute.xlu0 %69
    %73 = vset.pattern.permute.xlu0 0
    %74 = vperm.xlu0 %73, %v48
    %v75 = vpop.permute.xlu0 %74
    %78 = vset.pattern.permute.xlu0 0
    %79 = vperm.xlu0 %78, %v49
    %v80 = vpop.permute.xlu0 %79
    %83 = vset.pattern.permute.xlu0 0
    %84 = vperm.xlu0 %83, %v50
    %v85 = vpop.permute.xlu0 %84
    %88 = vset.pattern.permute.xlu0 0
    %89 = vperm.xlu0 %88, %v51
    %v90 = vpop.permute.xlu0 %89
    %93 = vset.pattern.permute.xlu0 0
    %94 = vperm.xlu0 %93, %v52
    %v95 = vpop.permute.xlu0 %94
    %98 = vset.pattern.permute.xlu0 0
    %99 = vperm.xlu0 %98, %v53
    %v100 = vpop.permute.xlu0 %99
    %103 = vset.pattern.permute.xlu0 0
    %104 = vperm.xlu0 %103, %v54
    %v105 = vpop.permute.xlu0 %104
    %108 = vset.pattern.permute.xlu0 0
    %109 = vperm.xlu0 %108, %v55
    %v110 = vpop.permute.xlu0 %109
    %113 = vset.pattern.permute.xlu0 0
    %114 = vperm.xlu0 %113, %v56
    %v115 = vpop.permute.xlu0 %114
    %118 = vset.pattern.permute.xlu0 0
    %119 = vperm.xlu0 %118, %v57
    %v120 = vpop.permute.xlu0 %119
    %123 = vset.pattern.permute.xlu0 0
    %124 = vperm.xlu0 %123, %v58
    %v125 = vpop.permute.xlu0 %124
    %128 = vset.pattern.permute.xlu0 0
    %129 = vperm.xlu0 %128, %v59
    %v130 = vpop.permute.xlu0 %129
    %133 = vset.pattern.permute.xlu0 0
    %134 = vperm.xlu0 %133, %v60
    %v135 = vpop.permute.xlu0 %134
    %138 = vset.pattern.permute.xlu0 0
    %139 = vperm.xlu0 %138, %v61
    %v140 = vpop.permute.xlu0 %139
    %v158 = vunpack.c.l.b16 %v22
    %v159 = vunpack.c.l.b16 %v23
    %v160 = vunpack.c.l.b16 %v24
    %v161 = vunpack.c.l.b16 %v25
    %v162 = vunpack.c.l.b16 %v26
    %v163 = vunpack.c.l.b16 %v27
    %v164 = vunpack.c.l.b16 %v28
    %v165 = vunpack.c.l.b16 %v29
    %v166 = vunpack.c.l.b16 %v30
    %v167 = vunpack.c.l.b16 %v31
    %v168 = vunpack.c.l.b16 %v32
    %v169 = vunpack.c.l.b16 %v33
    %v170 = vunpack.c.l.b16 %v34
    %v171 = vunpack.c.l.b16 %v35
    %v172 = vunpack.c.l.b16 %v36
    %v173 = vunpack.c.l.b16 %v37
    %v174 = vpack.c.b16 %v159, %v158
    %v175 = vpack.c.b16 %v161, %v160
    %v176 = vpack.c.b16 %v163, %v162
    %v177 = vpack.c.b16 %v165, %v164
    %v178 = vpack.c.b16 %v167, %v166
    %v179 = vpack.c.b16 %v169, %v168
    %v180 = vpack.c.b16 %v171, %v170
    %v181 = vpack.c.b16 %v173, %v172
    %v190 = vunpack.c.l.b16 %v38
    %v191 = vunpack.c.l.b16 %v39
    %v192 = vunpack.c.l.b16 %v40
    %v193 = vunpack.c.l.b16 %v41
    %v194 = vunpack.c.l.b16 %v42
    %v195 = vunpack.c.l.b16 %v43
    %v196 = vunpack.c.l.b16 %v44
    %v197 = vunpack.c.l.b16 %v45
    %v198 = vpack.c.b16 %v191, %v190
    %v199 = vpack.c.b16 %v193, %v192
    %v200 = vpack.c.b16 %v195, %v194
    %v201 = vpack.c.b16 %v197, %v196
    %vm206 = vcmask 523264
    %v208 = vsel %vm206, %v174, 0
    %v211 = vsel %vm206, %v175, 0
    %v214 = vsel %vm206, %v176, 0
    %v217 = vsel %vm206, %v177, 0
    %v220 = vsel %vm206, %v178, 0
    %v223 = vsel %vm206, %v179, 0
    %v226 = vsel %vm206, %v180, 0
    %v229 = vsel %vm206, %v181, 0
    %231 = vmatpush.bf16.msra.mxu0 0
    %232 = vmatpush.bf16.msra.mxu0 0
    %233 = vmatpush.bf16.msra.mxu0 0
    %234 = vmatpush.bf16.msra.mxu0 0
    %235 = vmatpush.bf16.msra.mxu0 %v201
    %236 = vmatpush.bf16.msra.mxu0 %v200
    %237 = vmatpush.bf16.msra.mxu0 %v199
    %238 = vmatpush.bf16.msra.mxu0 %v198
    %239 = vmatmul.bf16.gmra.mxu0 %v208
    %v240 = vpop.f32.mrf.mxu0
    %v241 = vadd.f32 %v65, %v240
    %v242 = vpop.f32.mrf.mxu0
    %v243 = vadd.f32 %v70, %v242
    %244 = vmatmul.bf16.gmra.mxu0 %v211
    %v245 = vpop.f32.mrf.mxu0
    %v246 = vadd.f32 %v75, %v245
    %v247 = vpop.f32.mrf.mxu0
    %v248 = vadd.f32 %v80, %v247
    %249 = vmatmul.bf16.gmra.mxu0 %v214
    %v250 = vpop.f32.mrf.mxu0
    %v251 = vadd.f32 %v85, %v250
    %v252 = vpop.f32.mrf.mxu0
    %v253 = vadd.f32 %v90, %v252
    %254 = vmatmul.bf16.gmra.mxu0 %v217
    %v255 = vpop.f32.mrf.mxu0
    %v256 = vadd.f32 %v95, %v255
    %v257 = vpop.f32.mrf.mxu0
    %v258 = vadd.f32 %v100, %v257
    %259 = vmatmul.bf16.gmra.mxu0 %v220
    %v260 = vpop.f32.mrf.mxu0
    %v261 = vadd.f32 %v105, %v260
    %v262 = vpop.f32.mrf.mxu0
    %v263 = vadd.f32 %v110, %v262
    %264 = vmatmul.bf16.gmra.mxu0 %v223
    %v265 = vpop.f32.mrf.mxu0
    %v266 = vadd.f32 %v115, %v265
    %v267 = vpop.f32.mrf.mxu0
    %v268 = vadd.f32 %v120, %v267
    %269 = vmatmul.bf16.gmra.mxu0 %v226
    %v270 = vpop.f32.mrf.mxu0
    %v271 = vadd.f32 %v125, %v270
    %v272 = vpop.f32.mrf.mxu0
    %v273 = vadd.f32 %v130, %v272
    %274 = vmatmul.bf16.gmra.mxu0 %v229
    %v275 = vpop.f32.mrf.mxu0
    %v276 = vadd.f32 %v135, %v275
    %v277 = vpop.f32.mrf.mxu0
    %v278 = vadd.f32 %v140, %v277
    %279 = vdwg.mxu0
    %v280 = vmax.f32 %v241, 0.0
    %v281 = vmax.f32 %v243, 0.0
    %v282 = vmax.f32 %v246, 0.0
    %v283 = vmax.f32 %v248, 0.0
    %v284 = vmax.f32 %v251, 0.0
    %v285 = vmax.f32 %v253, 0.0
    %v286 = vmax.f32 %v256, 0.0
    %v287 = vmax.f32 %v258, 0.0
    %v288 = vmax.f32 %v261, 0.0
    %v289 = vmax.f32 %v263, 0.0
    %v290 = vmax.f32 %v266, 0.0
    %v291 = vmax.f32 %v268, 0.0
    %v292 = vmax.f32 %v271, 0.0
    %v293 = vmax.f32 %v273, 0.0
    %v294 = vmax.f32 %v276, 0.0
    %v295 = vmax.f32 %v278, 0.0
    %v296 = vld [vmem:[%s2] sm:$0xf]
    %v297 = vld [vmem:[%s2 + $0x4] sm:$0xf]
    %v298 = vld [vmem:[%s2 + $0x8] sm:$0xf]
    %v299 = vld [vmem:[%s2 + $0xc] sm:$0xf]
    %v300 = vld [vmem:[%s2 + $0x10] sm:$0xf]
    %v301 = vld [vmem:[%s2 + $0x14] sm:$0xf]
    %v302 = vld [vmem:[%s2 + $0x18] sm:$0xf]
    %v303 = vld [vmem:[%s2 + $0x1c] sm:$0xf]
    %v304 = vpack.c.bf16 %v281, %v280
    %v305 = vpack.c.bf16 %v283, %v282
    %v306 = vpack.c.bf16 %v285, %v284
    %v307 = vpack.c.bf16 %v287, %v286
    %v308 = vpack.c.bf16 %v289, %v288
    %v309 = vpack.c.bf16 %v291, %v290
    %v310 = vpack.c.bf16 %v293, %v292
    %v311 = vpack.c.bf16 %v295, %v294
    %v312 = vld [vmem:[%s4] sm:$0xff]
    %v313 = vld [vmem:[%s4 + $0x8] sm:$0xff]
    %v314 = vld [vmem:[%s4 + $0x10] sm:$0xff]
    %v315 = vld [vmem:[%s4 + $0x18] sm:$0xff]
    %v316 = vld [vmem:[%s4 + $0x20] sm:$0xff]
    %v317 = vld [vmem:[%s4 + $0x28] sm:$0xff]
    %v318 = vld [vmem:[%s4 + $0x30] sm:$0xff]
    %v319 = vld [vmem:[%s4 + $0x38] sm:$0xff]
    %321 = vset.pattern.permute.xlu0 1
    %322 = vperm.xlu0 %321, %v312
    %v323 = vpop.permute.xlu0 %322
    %326 = vset.pattern.permute.xlu0 1
    %327 = vperm.xlu0 %326, %v313
    %v328 = vpop.permute.xlu0 %327
    %331 = vset.pattern.permute.xlu0 1
    %332 = vperm.xlu0 %331, %v314
    %v333 = vpop.permute.xlu0 %332
    %336 = vset.pattern.permute.xlu0 1
    %337 = vperm.xlu0 %336, %v315
    %v338 = vpop.permute.xlu0 %337
    %341 = vset.pattern.permute.xlu0 1
    %342 = vperm.xlu0 %341, %v316
    %v343 = vpop.permute.xlu0 %342
    %346 = vset.pattern.permute.xlu0 1
    %347 = vperm.xlu0 %346, %v317
    %v348 = vpop.permute.xlu0 %347
    %351 = vset.pattern.permute.xlu0 1
    %352 = vperm.xlu0 %351, %v318
    %v353 = vpop.permute.xlu0 %352
    %356 = vset.pattern.permute.xlu0 1
    %357 = vperm.xlu0 %356, %v319
    %v358 = vpop.permute.xlu0 %357
    %v368 = vunpack.c.l.b16 %v296
    %v369 = vunpack.c.l.b16 %v297
    %v370 = vunpack.c.l.b16 %v298
    %v371 = vunpack.c.l.b16 %v299
    %v372 = vunpack.c.l.b16 %v300
    %v373 = vunpack.c.l.b16 %v301
    %v374 = vunpack.c.l.b16 %v302
    %v375 = vunpack.c.l.b16 %v303
    %v376 = vpack.c.b16 %v369, %v368
    %v377 = vpack.c.b16 %v371, %v370
    %v378 = vpack.c.b16 %v373, %v372
    %v379 = vpack.c.b16 %v375, %v374
    %384 = vmatpush.bf16.msra.mxu0 %v311
    %385 = vmatpush.bf16.msra.mxu0 %v310
    %386 = vmatpush.bf16.msra.mxu0 %v309
    %387 = vmatpush.bf16.msra.mxu0 %v308
    %388 = vmatpush.bf16.msra.mxu0 %v307
    %389 = vmatpush.bf16.msra.mxu0 %v306
    %390 = vmatpush.bf16.msra.mxu0 %v305
    %391 = vmatpush.bf16.msra.mxu0 %v304
    %392 = vmatmul.bf16.gmra.mxu0 %v376
    %v393 = vpop.f32.mrf.mxu0
    %v394 = vadd.f32 %v323, %v393
    %v395 = vpop.f32.mrf.mxu0
    %v396 = vadd.f32 %v328, %v395
    %397 = vmatmul.bf16.gmra.mxu0 %v377
    %v398 = vpop.f32.mrf.mxu0
    %v399 = vadd.f32 %v333, %v398
    %v400 = vpop.f32.mrf.mxu0
    %v401 = vadd.f32 %v338, %v400
    %402 = vmatmul.bf16.gmra.mxu0 %v378
    %v403 = vpop.f32.mrf.mxu0
    %v404 = vadd.f32 %v343, %v403
    %v405 = vpop.f32.mrf.mxu0
    %v406 = vadd.f32 %v348, %v405
    %407 = vmatmul.bf16.gmra.mxu0 %v379
    %v408 = vpop.f32.mrf.mxu0
    %v409 = vadd.f32 %v353, %v408
    %v410 = vpop.f32.mrf.mxu0
    %v411 = vadd.f32 %v358, %v410
    %412 = vdwg.mxu0
    %v413 = vmax.f32 %v394, 0.0
    %v414 = vmax.f32 %v396, 0.0
    %v415 = vmax.f32 %v399, 0.0
    %v416 = vmax.f32 %v401, 0.0
    %v417 = vmax.f32 %v404, 0.0
    %v418 = vmax.f32 %v406, 0.0
    %v419 = vmax.f32 %v409, 0.0
    %v420 = vmax.f32 %v411, 0.0
    %v421 = vld [vmem:[%s3] sm:$0xf]
    %v422 = vld [vmem:[%s3 + $0x4] sm:$0xf]
    %v423 = vld [vmem:[%s3 + $0x8] sm:$0xf]
    %v424 = vld [vmem:[%s3 + $0xc] sm:$0xf]
    %v425 = vpack.c.bf16 %v414, %v413
    %v426 = vpack.c.bf16 %v416, %v415
    %v427 = vpack.c.bf16 %v418, %v417
    %v428 = vpack.c.bf16 %v420, %v419
    %v429 = vld [vmem:[%s4] sm:$0xff]
    %v430 = vld [vmem:[%s4 + $0x8] sm:$0xff]
    %v431 = vld [vmem:[%s4 + $0x10] sm:$0xff]
    %v432 = vld [vmem:[%s4 + $0x18] sm:$0xff]
    %434 = vset.pattern.permute.xlu0 2
    %435 = vperm.xlu0 %434, %v429
    %v436 = vpop.permute.xlu0 %435
    %439 = vset.pattern.permute.xlu0 2
    %440 = vperm.xlu0 %439, %v430
    %v441 = vpop.permute.xlu0 %440
    %444 = vset.pattern.permute.xlu0 2
    %445 = vperm.xlu0 %444, %v431
    %v446 = vpop.permute.xlu0 %445
    %449 = vset.pattern.permute.xlu0 2
    %450 = vperm.xlu0 %449, %v432
    %v451 = vpop.permute.xlu0 %450
    %v457 = vunpack.c.l.b16 %v421
    %v458 = vunpack.c.l.b16 %v422
    %v459 = vunpack.c.l.b16 %v423
    %v460 = vunpack.c.l.b16 %v424
    %v461 = vpack.c.b16 %v458, %v457
    %v462 = vpack.c.b16 %v460, %v459
    %v464 = vsel %vm206, %v461, 0
    %v467 = vsel %vm206, %v462, 0
    %469 = vmatpush.bf16.msra.mxu0 0
    %470 = vmatpush.bf16.msra.mxu0 0
    %471 = vmatpush.bf16.msra.mxu0 0
    %472 = vmatpush.bf16.msra.mxu0 0
    %473 = vmatpush.bf16.msra.mxu0 %v428
    %474 = vmatpush.bf16.msra.mxu0 %v427
    %475 = vmatpush.bf16.msra.mxu0 %v426
    %476 = vmatpush.bf16.msra.mxu0 %v425
    %477 = vmatmul.bf16.gmra.mxu0 %v464
    %v478 = vpop.f32.mrf.mxu0
    %v479 = vadd.f32 %v436, %v478
    %v480 = vpop.f32.mrf.mxu0
    %v481 = vadd.f32 %v441, %v480
    %482 = vmatmul.bf16.gmra.mxu0 %v467
    %v483 = vpop.f32.mrf.mxu0
    %v484 = vadd.f32 %v446, %v483
    %v485 = vpop.f32.mrf.mxu0
    %v486 = vadd.f32 %v451, %v485
    %487 = vdwg.mxu0
    %v488 = vmax.f32 %v479, 0.0
    %v489 = vmax.f32 %v481, 0.0
    %v490 = vmax.f32 %v484, 0.0
    %v491 = vmax.f32 %v486, 0.0
    %492 = vset.pattern.permute.xlu0 3
    %493 = vperm.xlu0 %492, %v429
    %v494 = vpop.permute.xlu0 %493
    %496 = vset.pattern.permute.xlu0 3
    %497 = vperm.xlu0 %496, %v430
    %v498 = vpop.permute.xlu0 %497
    %500 = vset.pattern.permute.xlu0 3
    %501 = vperm.xlu0 %500, %v431
    %v502 = vpop.permute.xlu0 %501
    %504 = vset.pattern.permute.xlu0 3
    %505 = vperm.xlu0 %504, %v432
    %v506 = vpop.permute.xlu0 %505
    %v508 = vmul.f32 %v488, %v494
    %v509 = vmul.f32 %v489, %v498
    %v510 = vmul.f32 %v490, %v502
    %v511 = vmul.f32 %v491, %v506
    %v512 = vadd.f32 %v508, %v509
    %v513 = vadd.f32 %v512, %v510
    %v514 = vadd.f32 %v513, %v511
    %v515 = vrot.slane %v514, 4
    %v516 = vadd.f32 %v514, %v515
    %v517 = vrot.slane %v516, 2
    %v518 = vadd.f32 %v516, %v517
    %v519 = vrot.slane %v518, 1
    %v520 = vadd.f32 %v518, %v519
    %v521 = vld [vmem:[%s4] sm:$0x1]
    %523 = vset.pattern.permute.xlu0 4
    %524 = vperm.xlu0 %523, %v521
    %v525 = vpop.permute.xlu0 %524
    %v527 = vadd.f32 %v520, %v525
    %528 = vst [vmem:[#allocation2] sm:$0x1] %v527
    // Predicated region
    $region22: #{tpu_custom_call.1} parent=1 // pred_check
      _
    $region23: #{tpu_custom_call.1} parent=1 // pred_check_branch
      %530 = sbr.rel (0) target = $region25
    $region24: #{tpu_custom_call.1} parent=1 // pred_region
      %532 = vsyncadd [#allocation3], 0
      %s534 = sshll.u32 [#allocation2], 4
      %s535 = int_to_ptr.vmem [resolvable:$true] %s534
      %s536 = sshll.u32 %s5, 4
      %s537 = int_to_ptr.hbm [resolvable:$true] %s536
      %539 = dma.vmem_to_hbm [thread:$0]  %s535, 16, %s537, [#allocation3]
    $region25: #{tpu_custom_call.1} parent=1 // pred_fallthru
      _
    // Predicated region
    $region26: #{tpu_custom_call.1} parent=1 // pred_check
      _
    $region27: #{tpu_custom_call.1} parent=1 // pred_check_branch
      %541 = sbr.rel (0) target = $region29
    $region28: #{tpu_custom_call.1} parent=1 // pred_region
      %543 = dma.done [#allocation3], 16
    $region29: #{tpu_custom_call.1} parent=1 // pred_fallthru
      _
    %544 = vsyncpa [#allocation3], 1

</llo_original>
